<compile_context>
chip_gen: v7x
topology: tpu7x:2x2x1
jax: 0.10.0
libtpu: 0.0.40
codegen_flags: <defaults>
</compile_context>

<pallas_src>
import functools

import jax
import jax.numpy as jnp
from jax import lax
from jax.experimental import pallas as pl
from jax.experimental.pallas import tpu as pltpu

_VMEM_LIMIT = 32 * 1024 * 1024


# ----------------------------------------------------------------------------
# tiling helpers
# ----------------------------------------------------------------------------
def _tile(dim, pref, align):
    """Largest t <= pref with t % align == 0 and dim % t == 0, else full dim."""
    t = min(pref, dim)
    t = (t // align) * align
    while t >= align:
        if dim % t == 0:
            return t
        t -= align
    return dim


def _round_up(x, m):
    return ((x + m - 1) // m) * m


# ----------------------------------------------------------------------------
# fused tiled matmul (+ bias, + optional LayerNorm epilogue), bf16 out
# ----------------------------------------------------------------------------
def _matmul_kernel(x_ref, w_ref, b_ref, g_ref, be_ref, o_ref, acc_ref, *,
                   apply_ln):
    k = pl.program_id(2)

    @pl.when(k == 0)
    def _():
        acc_ref[...] = jnp.zeros_like(acc_ref)

    x = x_ref[...]
    if x.dtype != jnp.bfloat16:          # trace-time check: no-op for bf16 inputs
        x = x.astype(jnp.bfloat16)
    acc_ref[...] += jnp.dot(x, w_ref[...], preferred_element_type=jnp.float32)

    @pl.when(k == pl.num_programs(2) - 1)
    def _():
        y = acc_ref[...] + b_ref[...]                  # f32 epilogue
        if apply_ln:                                   # static flag
            mu = jnp.mean(y, axis=-1, keepdims=True)
            var = jnp.mean(jnp.square(y - mu), axis=-1, keepdims=True)
            y = (y - mu) * lax.rsqrt(var + 1e-5) * g_ref[...] + be_ref[...]
        o_ref[...] = y.astype(o_ref.dtype)


def fused_linear(x, w_t, bias=None, ln=None, out_dtype=jnp.bfloat16):
    """y = x @ w_t (+ bias), optional fused LayerNorm, bf16 output.

    w_t is (K, N), pre-transposed (PyTorch weight is (N, K)) and stored bf16."""
    M, K = x.shape
    K2, N = w_t.shape
    assert K == K2
    tm = _tile(M, 512, 8)
    tk = _tile(K, 1024, 128)
    if ln is not None:
        tn = N                                          # LN needs the full row
        max_tm = max(8, ((6 << 20) // (N * 4)) // 8 * 8)
        tm = _tile(M, min(tm, max_tm), 8)
    else:
        tn = _tile(N, 1024, 128)
    fuse_ln = ln is not None

    b = (bias if bias is not None else jnp.zeros((N,), jnp.float32))
    b = b.reshape(1, N).astype(jnp.float32)
    if fuse_ln:
        g = ln[0].reshape(1, N).astype(jnp.float32)
        be = ln[1].reshape(1, N).astype(jnp.float32)
    else:
        g = jnp.ones((1, N), jnp.float32)
        be = jnp.zeros((1, N), jnp.float32)

    return pl.pallas_call(
        functools.partial(_matmul_kernel, apply_ln=fuse_ln),
        grid=(M // tm, N // tn, K // tk),
        in_specs=[pl.BlockSpec((tm, tk), lambda i, j, k: (i, k)),
                  pl.BlockSpec((tk, tn), lambda i, j, k: (k, j)),
                  pl.BlockSpec((1, tn), lambda i, j, k: (0, j)),
                  pl.BlockSpec((1, tn), lambda i, j, k: (0, j)),
                  pl.BlockSpec((1, tn), lambda i, j, k: (0, j))],
        out_specs=pl.BlockSpec((tm, tn), lambda i, j, k: (i, j)),
        out_shape=jax.ShapeDtypeStruct((M, N), out_dtype),
        scratch_shapes=[pltpu.VMEM((tm, tn), jnp.float32)],
        compiler_params=pltpu.CompilerParams(
            dimension_semantics=("parallel", "parallel", "arbitrary"),
            vmem_limit_bytes=_VMEM_LIMIT),
    )(x, w_t, b, g, be)


# ----------------------------------------------------------------------------
# row-tiled LayerNorm (standalone uses), f32 math, bf16 output
# ----------------------------------------------------------------------------
def _layernorm_kernel(x_ref, g_ref, b_ref, o_ref):
    x = x_ref[...].astype(jnp.float32)
    mu = jnp.mean(x, axis=-1, keepdims=True)
    var = jnp.mean(jnp.square(x - mu), axis=-1, keepdims=True)
    y = (x - mu) * lax.rsqrt(var + 1e-5) * g_ref[...] + b_ref[...]
    o_ref[...] = y.astype(o_ref.dtype)


def pallas_layernorm(x2d, gamma, beta, out_dtype=jnp.bfloat16):
    R, D = x2d.shape
    tr = _tile(R, 512, 8)
    g = gamma.reshape(1, D).astype(jnp.float32)
    b = beta.reshape(1, D).astype(jnp.float32)
    return pl.pallas_call(
        _layernorm_kernel,
        grid=(R // tr,),
        in_specs=[pl.BlockSpec((tr, D), lambda i: (i, 0)),
                  pl.BlockSpec((1, D), lambda i: (0, 0)),
                  pl.BlockSpec((1, D), lambda i: (0, 0))],
        out_specs=pl.BlockSpec((tr, D), lambda i: (i, 0)),
        out_shape=jax.ShapeDtypeStruct((R, D), out_dtype),
        compiler_params=pltpu.CompilerParams(dimension_semantics=("parallel",)),
    )(x2d, g, b)


# ----------------------------------------------------------------------------
# attention: grid over (batch, query-tile), on-chip causal mask, per-head MXU
# ----------------------------------------------------------------------------
def _attention_kernel(q_ref, kv_ref, o_ref, *, num_heads, mem_len):
    tl, proj = q_ref.shape                   # batch dim squeezed into the grid
    S = kv_ref.shape[0]
    hd = proj // num_heads
    scale = float(hd) ** -0.5
    li = pl.program_id(1)

    # additive causal mask (Model.set_mask, same_length=False), built on-chip
    row = lax.broadcasted_iota(jnp.int32, (tl, S), 0) + (li * tl + mem_len)
    col = lax.broadcasted_iota(jnp.int32, (tl, S), 1)
    mask = jnp.where(col > row, -10000.0, 0.0).astype(jnp.float32)

    q = q_ref[...]                           # (tl, proj) bf16
    kv = kv_ref[...]                         # (S, 2*proj) bf16
    # TODO(synk): for very long S, tile S with an online softmax (flash-style);
    # with bf16 kv and batch out of the block the full-S tile fits comfortably.
    for h in range(num_heads):
        sl = slice(h * hd, (h + 1) * hd)
        qh = q[:, sl]
        kh = kv[:, sl]
        vh = kv[:, proj + h * hd: proj + (h + 1) * hd]
        s = lax.dot_general(qh, kh, (((1,), (1,)), ((), ())),
                            preferred_element_type=jnp.float32)
        s = s * scale + mask
        s = s - jnp.max(s, axis=-1, keepdims=True)
        p = jnp.exp(s)
        p = p * pl.reciprocal(jnp.sum(p, axis=-1, keepdims=True), approx=True)
        out_h = jnp.dot(p.astype(jnp.bfloat16), vh,
                        preferred_element_type=jnp.float32)
        o_ref[:, sl] = out_h.astype(o_ref.dtype)


def pallas_attention(q, kv, num_heads, mem_len):
    """q: (B, L, proj) bf16; kv: (B, S, 2*proj) bf16 = [k | v] batch-major."""
    B, L, proj = q.shape
    S = kv.shape[1]
    tl = _tile(L, 128, 8)
    return pl.pallas_call(
        functools.partial(_attention_kernel, num_heads=num_heads,
                          mem_len=mem_len),
        grid=(B, L // tl),
        in_specs=[pl.BlockSpec((None, tl, proj), lambda b, i: (b, i, 0)),
                  pl.BlockSpec((None, S, 2 * proj), lambda b, i: (b, 0, 0))],
        out_specs=pl.BlockSpec((None, tl, proj), lambda b, i: (b, i, 0)),
        out_shape=jax.ShapeDtypeStruct((B, L, proj), jnp.bfloat16),
        compiler_params=pltpu.CompilerParams(
            dimension_semantics=("parallel", "parallel")),
    )(q, kv)


# ----------------------------------------------------------------------------
# SRU elementwise recurrence: grid = (feature-chunks "parallel", L-chunks)
# bf16 u stream, f32 c/h state carried in a revisited output block
# ----------------------------------------------------------------------------
def _sru_kernel(u_ref, x_ref, c0_ref, fw_ref, rw_ref, fb_ref, rb_ref,
                h_ref, c_ref, *, chunk, unroll):
    li = pl.program_id(1)
    B, dc = c_ref.shape

    @pl.when(li == 0)
    def _():
        c_ref[...] = c0_ref[...]

    # broadcasts hoisted out of the time loop (JAX does not CSE broadcast_in_dim)
    fw = jnp.broadcast_to(fw_ref[...], (B, dc))
    rw = jnp.broadcast_to(rw_ref[...], (B, dc))
    fb = jnp.broadcast_to(fb_ref[...], (B, dc))
    rb = jnp.broadcast_to(rb_ref[...], (B, dc))

    def body(t, c_prev):
        u_t = u_ref[t].astype(jnp.float32)           # (B, 3, dc) contiguous gates
        u0, u1, u2 = u_t[:, 0, :], u_t[:, 1, :], u_t[:, 2, :]
        x_t = x_ref[t].astype(jnp.float32)           # residual / skip
        f = jax.nn.sigmoid(u1 + c_prev * fw + fb)
        r = jax.nn.sigmoid(u2 + c_prev * rw + rb)
        c_t = u0 + (c_prev - u0) * f
        h_ref[t] = ((c_t - x_t) * r + x_t).astype(h_ref.dtype)   # g(c)=c
        return c_t

    c_ref[...] = lax.fori_loop(0, chunk, body, c_ref[...], unroll=unroll)


def pallas_sru_recurrence(u, x_resid, c0, weight_c, bias):
    """u: (L, B, 3d) bf16 with contiguous [cand|forget|reset] thirds,
    x_resid: (L, B, d), c0: (B, d) f32.  Returns h: (L, B, d) f32, c_final."""
    L, B, d3 = u.shape
    d = d3 // 3
    u4 = u.reshape(L, B, 3, d)                       # free reshape
    Lc = _tile(L, 32, 1)
    dc = _tile(d, max(128, d // 2), 128)             # feature chunks (2 TCs on v7x)
    unroll = True if Lc <= 8 else 8

    fw = weight_c[:d].reshape(1, d).astype(jnp.float32)
    rw = weight_c[d:].reshape(1, d).astype(jnp.float32)
    fb = bias[:d].reshape(1, d).astype(jnp.float32)
    rb = bias[d:].reshape(1, d).astype(jnp.float32)
    vec = lambda: pl.BlockSpec((1, dc), lambda di, li: (0, di))

    h, c = pl.pallas_call(
        functools.partial(_sru_kernel, chunk=Lc, unroll=unroll),
        grid=(d // dc, L // Lc),
        in_specs=[pl.BlockSpec((Lc, B, 3, dc), lambda di, li: (li, 0, 0, di)),
                  pl.BlockSpec((Lc, B, dc), lambda di, li: (li, 0, di)),
                  pl.BlockSpec((B, dc), lambda di, li: (0, di)),
                  vec(), vec(), vec(), vec()],
        out_specs=[pl.BlockSpec((Lc, B, dc), lambda di, li: (li, 0, di)),
                   pl.BlockSpec((B, dc), lambda di, li: (0, di))],
        out_shape=(jax.ShapeDtypeStruct((L, B, d), jnp.float32),
                   jax.ShapeDtypeStruct((B, d), jnp.float32)),
        compiler_params=pltpu.CompilerParams(
            dimension_semantics=("parallel", "arbitrary")),
    )(u4, x_resid, c0, fw, rw, fb, rb)
    return h, c


# ----------------------------------------------------------------------------
# streaming adaptive-softmax: pure online log-sum-exp over vocab tiles
# (never writes a (rows, vocab) logits / logprob matrix to HBM)
# ----------------------------------------------------------------------------
def _stream_lse_kernel(ph_ref, w_ref, b_ref, lse_ref, m_sc, l_sc):
    vi = pl.program_id(1)

    @pl.when(vi == 0)
    def _():
        m_sc[...] = jnp.full_like(m_sc, -jnp.inf)
        l_sc[...] = jnp.zeros_like(l_sc)

    s = jnp.dot(ph_ref[...], w_ref[...],
                preferred_element_type=jnp.float32) + b_ref[...]
    m_prev = m_sc[...]
    m_new = jnp.maximum(m_prev, jnp.max(s, axis=-1, keepdims=True))
    l_sc[...] = (l_sc[...] * jnp.exp(m_prev - m_new)
                 + jnp.sum(jnp.exp(s - m_new), axis=-1, keepdims=True))
    m_sc[...] = m_new

    @pl.when(vi == pl.num_programs(1) - 1)
    def _():
        lse_ref[...] = m_sc[...] + jnp.log(l_sc[...])


def pallas_streaming_lse(ph, w_t, bias_pad):
    """lse[r, 0] = logsumexp_v (ph @ w_t + bias_pad)[r, v]   (padded cols have
    bias -1e30 in f32 so they never contribute)."""
    R, E = ph.shape
    _, V = w_t.shape
    tr = _tile(R, 512, 8)
    tv = _tile(V, 1024, 128)
    b = bias_pad.reshape(1, V).astype(jnp.float32)
    return pl.pallas_call(
        _stream_lse_kernel,
        grid=(R // tr, V // tv),
        in_specs=[pl.BlockSpec((tr, E), lambda i, j: (i, 0)),
                  pl.BlockSpec((E, tv), lambda i, j: (0, j)),
                  pl.BlockSpec((1, tv), lambda i, j: (0, j))],
        out_specs=pl.BlockSpec((tr, 1), lambda i, j: (i, 0)),
        out_shape=jax.ShapeDtypeStruct((R, 1), jnp.float32),
        scratch_shapes=[pltpu.VMEM((tr, 1), jnp.float32),
                        pltpu.VMEM((tr, 1), jnp.float32)],
        compiler_params=pltpu.CompilerParams(
            dimension_semantics=("parallel", "arbitrary"),
            vmem_limit_bytes=_VMEM_LIMIT),
    )(ph, w_t, b)


# ----------------------------------------------------------------------------
# Model pieces (glue in plain JAX, heavy compute in the kernels above)
# ----------------------------------------------------------------------------
def adaptive_embedding(embp, tokens):
    # div_val == 1 branch; scale_emb=False; emb_dropout is identity (eval).
    L, B = tokens.shape
    # TODO(synk): data-dependent token-row gather stays in XLA.
    emb = embp['emb_weight'][tokens.reshape(-1)]
    emb = fused_linear(emb, embp['emb_proj_t'])        # F.linear(embed, proj)
    return emb.reshape(L, B, -1)


def srupp_projected_linear(p, x):
    L, B, Din = x.shape
    # linear1 -> LayerNorm fused into the matmul epilogue, then linear2
    z = fused_linear(x.reshape(L * B, Din), p['lin1_wt'],
                     ln=(p['ln_g'], p['ln_b']))
    u = fused_linear(z, p['lin2_wt'])                  # (L*B, 3d) bf16
    return u.reshape(L, B, -1)


def srupp_attention(p, x, memory, mem_len, num_heads):
    L, B, Din = x.shape
    if memory is None:
        concat = x
    else:
        concat = jnp.concatenate([memory.astype(x.dtype), x], axis=0)
    S = concat.shape[0]
    proj = p['lin1_wt'].shape[1]

    z = fused_linear(concat.reshape(S * B, Din), p['lin1_wt'])       # bf16
    z3 = z.reshape(S, B, proj)
    residual = z3[mem_len:]                            # (L, B, proj), pre-LN
    z_ln = pallas_layernorm(z, p['ln_g'], p['ln_b'])   # attn_layer_norm=True
    z_ln3 = z_ln.reshape(S, B, proj)
    kv = fused_linear(z_ln, p['lin2_wt']).reshape(S, B, 2 * proj)    # [k | v]

    # batch-major layout for the (B, L-tile) attention grid
    q_bm = jnp.transpose(z_ln3[mem_len:], (1, 0, 2))   # (B, L, proj)
    kv_bm = jnp.transpose(kv, (1, 0, 2))               # (B, S, 2*proj)
    attn_bm = pallas_attention(q_bm, kv_bm, num_heads, mem_len)
    attn = jnp.transpose(attn_bm, (1, 0, 2))           # (L, B, proj)

    attn = (attn * p['alpha'] + residual).astype(jnp.bfloat16)   # rezero residual
    # attn_dropout / dropout are identity in eval mode
    u = fused_linear(attn.reshape(L * B, proj), p['lin3_wt'])    # (L*B, 3d)
    return u.reshape(L, B, -1)


def srupp_cell(p, x, c0, memory, mem_len, num_heads):
    L, B, d = x.shape
    residual = x
    x_ln = pallas_layernorm(x.reshape(L * B, d),
                            p['cell_ln_g'], p['cell_ln_b']).reshape(L, B, d)
    if p['is_attention']:
        u = srupp_attention(p, x_ln, memory, mem_len, num_heads)
    else:
        u = srupp_projected_linear(p, x_ln)            # ignores memory
    h, c = pallas_sru_recurrence(u, residual, c0, p['weight_c'], p['bias'])
    return h, c


def srupp_forward(layers, x, c0, memory, num_heads):
    saved_inputs, cs = [], []
    h = x
    for i, lp in enumerate(layers):
        saved_inputs.append(h)
        mem_i = memory[i] if memory is not None else None
        mem_len = 0 if mem_i is None else mem_i.shape[0]
        h, c = srupp_cell(lp, h, c0[i], mem_i, mem_len, num_heads)
        cs.append(c)
    return h, jnp.stack(cs, axis=0), saved_inputs


def adaptive_logsoftmax(outp, hidden, target, cutoffs, n_token):
    """ProjectedAdaptiveLogSoftmax NLL (div_val=1), per-token, original order.
    LSE over the vocab is a streaming Pallas kernel; the <=4 target-column
    picks per row are a tiny XLA gather + dot outside the vocab loop."""
    cutoff_ends = [0] + list(cutoffs) + [n_token]
    n_clusters = len(cutoffs)
    v_head = cutoff_ends[1] + n_clusters

    ph0 = fused_linear(hidden, outp['proj'][0])        # h @ proj  (bf16)
    lse_h = pallas_streaming_lse(ph0, outp['head_w_t'], outp['head_b_pad'])

    ph0_f = ph0.astype(jnp.float32)
    # col 0: head logprob of the (clipped) target; col i: head column v_head-i
    # (transformer-XL's head_logprob[:, -i] quirk).
    cols = jnp.stack(
        [jnp.clip(target, 0, cutoff_ends[1] - 1)] +
        [jnp.full_like(target, v_head - i) for i in range(1, n_clusters + 1)],
        axis=1)
    w_rows = outp['head_w'][cols]                      # (R, C, E)  XLA gather
    b_rows = outp['head_b'][cols]                      # (R, C)
    picked_h = jnp.einsum('re,rce->rc', ph0_f, w_rows) + b_rows
    head_lp = picked_h - lse_h                         # broadcast over (R, 1)

    logprob = head_lp[:, 0]
    for i in range(1, n_clusters + 1):
        l_idx, r_idx = cutoff_ends[i], cutoff_ends[i + 1]
        # TODO(synk): at WT103 scale, compact the rows that fall in this cluster
        # (scalar-prefetch row indices) before the tail matmul/LSE instead of
        # running the full tail over every row and masking.
        ph_i = fused_linear(hidden, outp['proj'][i])
        lse_t = pallas_streaming_lse(ph_i, outp['tail_w_t'][i - 1],
                                     outp['tail_b_pad'][i - 1])[:, 0]
        tgt_i = jnp.clip(target, l_idx, r_idx - 1)
        w_rows_i = outp['out_weight'][tgt_i]           # (R, E)
        picked_t = (jnp.einsum('re,re->r', ph_i.astype(jnp.float32), w_rows_i)
                    + outp['out_bias'][tgt_i])
        lp_i = head_lp[:, i] + (picked_t - lse_t)
        in_cluster = (target >= l_idx) & (target < r_idx)
        logprob = jnp.where(in_cluster, lp_i, logprob)
    # TODO(synk): reference keep_order=False packs losses in cluster order;
    # values are identical, returned here in original token order.
    return -logprob


def model_forward(params, x, y, hidden, memory, config):
    L, B = x.shape
    emb = adaptive_embedding(params['embedding'], x)   # dropouts identity (eval)
    out, hidden_out, saved_inputs = srupp_forward(
        params['layers'], emb, hidden, memory, config['attn_heads'])
    out2d = out.reshape(-1, out.shape[2])
    nll = adaptive_logsoftmax(params['output'], out2d, y.reshape(-1),
                              config['cutoffs'], config['n_token'])
    loss = nll.reshape(y.shape[0], -1)
    return loss, hidden_out, saved_inputs


# ----------------------------------------------------------------------------
# Deterministic parameter init (PyTorch layouts -> kernel-facing layouts once)
# ----------------------------------------------------------------------------
def init_params(key, config):
    n_token, n_e, n_d, n_proj = (config['n_token'], config['n_e'],
                                 config['n_d'], config['n_proj'])
    depth = config['depth']
    cutoffs = config['cutoffs']
    n_clusters = len(cutoffs)
    cutoff_ends = [0] + list(cutoffs) + [n_token]
    keys = iter(jax.random.split(key, 64))

    def uni(shape, scale):
        return jax.random.uniform(next(keys), shape, jnp.float32, -scale, scale)

    def xavier(shape):
        a = (6.0 / (shape[0] + shape[1])) ** 0.5
        return jax.random.uniform(next(keys), shape, jnp.float32, -a, a)

    bf16 = lambda t: t.astype(jnp.bfloat16)

    init_range = (3.0 / n_d) ** 0.5
    out_weight = uni((n_token, n_e), init_range)       # out_layers[0].weight
    out_bias = jnp.zeros((n_token,), jnp.float32)      # bias zeroed
    out_projs = [xavier((n_d, n_e)) for _ in range(n_clusters + 1)]
    cluster_weight = uni((n_clusters, n_e), 0.1)
    cluster_bias = jnp.zeros((n_clusters,), jnp.float32)

    def pad_vocab(w_t, b):
        """Pad the vocab (lane) axis to a multiple of 128: zero weights and a
        -1e30 bias (kept in f32!) so padded logits never affect the LSE."""
        v = w_t.shape[1]
        vp = _round_up(v, 128)
        if vp == v:
            return bf16(w_t), b.astype(jnp.float32)
        wp = jnp.pad(w_t, ((0, 0), (0, vp - v)))
        bp = jnp.pad(b, (0, vp - v), constant_values=-1e30)
        return bf16(wp), bp.astype(jnp.float32)

    head_w = jnp.concatenate([out_weight[:cutoff_ends[1]], cluster_weight], 0)
    head_b = jnp.concatenate([out_bias[:cutoff_ends[1]], cluster_bias], 0)
    head_w_t, head_b_pad = pad_vocab(head_w.T, head_b)
    tail_w_t, tail_b_pad = [], []
    for i in range(1, n_clusters + 1):
        l_idx, r_idx = cutoff_ends[i], cutoff_ends[i + 1]
        wt, bb = pad_vocab(out_weight[l_idx:r_idx].T, out_bias[l_idx:r_idx])
        tail_w_t.append(wt)
        tail_b_pad.append(bb)

    output_params = dict(
        proj=[bf16(p) for p in out_projs],             # (n_d, n_e); logits use h @ proj
        out_weight=out_weight, out_bias=out_bias,      # f32, for target-row gathers
        head_w=head_w, head_b=head_b,                  # f32 unpadded head rows
        head_w_t=head_w_t, head_b_pad=head_b_pad,      # bf16/f32 padded (streaming LSE)
        tail_w_t=tail_w_t, tail_b_pad=tail_b_pad)

    # embedding shares weights / projections with the output layer
    embedding_params = dict(
        emb_weight=out_weight,                         # (n_token, n_e) for the gather
        emb_proj_t=bf16(out_projs[0].T))               # (n_e, n_d) for F.linear(embed, proj)

    # SRU's transform output interleaves (feature j, gate k) at column j*3+k;
    # permute weight rows once at init so u is contiguous [cand|forget|reset]
    # thirds -> the (L, B, 3, d) reshape in the recurrence kernel is free.
    gate_perm = jnp.array([j * 3 + g for g in range(3) for j in range(n_d)],
                          jnp.int32)

    layers = []
    for l in range(depth):
        is_attn = ((l + 1) % config['attn_every_n_layers'] == 0)
        lp = dict(
            is_attention=is_attn,
            cell_ln_g=jnp.ones((n_d,), jnp.float32),
            cell_ln_b=jnp.zeros((n_d,), jnp.float32),
            ln_g=jnp.ones((n_proj,), jnp.float32),
            ln_b=jnp.zeros((n_proj,), jnp.float32),
            lin1_wt=bf16(xavier((n_proj, n_d)).T),                     # (n_d, proj)
            weight_c=uni((2 * n_d,), 0.5),
            bias=jnp.concatenate([jnp.zeros((n_d,), jnp.float32),
                                  jnp.full((n_d,), config['highway_bias'],
                                           jnp.float32)]),
        )
        if is_attn:
            lp['lin2_wt'] = bf16(xavier((2 * n_proj, n_proj)).T)       # (proj, 2*proj) -> [k|v]
            lp['lin3_wt'] = bf16(xavier((3 * n_d, n_proj))[gate_perm].T)   # (proj, 3d)
            lp['alpha'] = jnp.float32(0.0)             # rezero alpha, reference init
        else:
            lp['lin2_wt'] = bf16(xavier((3 * n_d, n_proj))[gate_perm].T)   # (proj, 3d)
        layers.append(lp)

    return dict(embedding=embedding_params, output=output_params, layers=layers)


# ----------------------------------------------------------------------------
if __name__ == "__main__":
    config = dict(
        n_token=40, n_e=16, n_d=32, n_proj=16, depth=2, attn_heads=2,
        attn_every_n_layers=2, highway_bias=-2.0,
        cutoffs=[8, 16, 32],   # scaled down from [19997, 39997, 199997]
    )
    L, B, M = 8, 2, 8

    key = jax.random.PRNGKey(0)
    kp, kx, ky, km = jax.random.split(key, 4)
    params = init_params(kp, config)

    x = jax.random.randint(kx, (L, B), 0, config['n_token'], dtype=jnp.int32)
    y = jax.random.randint(ky, (L, B), 0, config['n_token'], dtype=jnp.int32)
    hidden = jnp.zeros((config['depth'], B, config['n_d']), jnp.float32)
    mkeys = jax.random.split(km, config['depth'])
    memory = [0.1 * jax.random.normal(mkeys[i], (M, B, config['n_d']),
                                      jnp.float32)
              for i in range(config['depth'])]

    loss, hidden_out, memory_out = model_forward(params, x, y, hidden, memory,
                                                 config)
    jax.block_until_ready((loss, hidden_out, memory_out))

    assert loss.shape == (L, B)
    assert hidden_out.shape == (config['depth'], B, config['n_d'])
    assert len(memory_out) == config['depth']
    assert bool(jnp.all(jnp.isfinite(loss)))
    print("KERNEL_OK")
</pallas_src>

<mosaic_0001>
module attributes {stable_mosaic.version = 11 : i64} {
  func.func @_matmul_kernel(%arg0: i32, %arg1: i32, %arg2: i32, %arg3: memref<16x16xf32, #tpu.memory_space<vmem>>, %arg4: memref<16x32xbf16, #tpu.memory_space<vmem>>, %arg5: memref<1x32xf32, #tpu.memory_space<vmem>>, %arg6: memref<1x32xf32, #tpu.memory_space<vmem>>, %arg7: memref<1x32xf32, #tpu.memory_space<vmem>>, %arg8: memref<16x32xbf16, #tpu.memory_space<vmem>>, %arg9: memref<16x32xf32, #tpu.memory_space<vmem>>) attributes {dimension_semantics = [#tpu.dimension_semantics<parallel>, #tpu.dimension_semantics<parallel>, #tpu.dimension_semantics<arbitrary>], iteration_bounds = array<i64: 1, 1, 1>, scalar_prefetch = 0 : i64, scratch_operands = 1 : i64, tpu.core_type = #tpu.core_type<tc>, window_params = [{transform_indices = @transform_0, window_bounds = array<i64: 16, 16>}, {transform_indices = @transform_1, window_bounds = array<i64: 16, 32>}, {transform_indices = @transform_2, window_bounds = array<i64: 1, 32>}, {transform_indices = @transform_3, window_bounds = array<i64: 1, 32>}, {transform_indices = @transform_4, window_bounds = array<i64: 1, 32>}, {transform_indices = @transform_5, window_bounds = array<i64: 16, 32>}]} {
    %c0_i32 = arith.constant 0 : i32
    %0 = arith.cmpi eq, %arg2, %c0_i32 : i32
    %1 = arith.extui %0 : i1 to i32
    %c0_i32_0 = arith.constant 0 : i32
    %2 = arith.cmpi ne, %1, %c0_i32_0 : i32
    scf.if %2 {
      %cst_10 = arith.constant 0.000000e+00 : f32
      %13 = vector.broadcast %cst_10 : f32 to vector<16x32xf32>
      %c0_11 = arith.constant 0 : index
      %c0_12 = arith.constant 0 : index
      %14 = vector.load %arg9[%c0_11, %c0_12] : memref<16x32xf32, #tpu.memory_space<vmem>>, vector<16x32xf32>
      tpu.vector_store %arg9[%c0_11, %c0_12], %13 {strides = array<i32>} : memref<16x32xf32, #tpu.memory_space<vmem>>, vector<16x32xf32>,
    } else {
    }
    %c0 = arith.constant 0 : index
    %c0_1 = arith.constant 0 : index
    %3 = vector.load %arg3[%c0, %c0_1] : memref<16x16xf32, #tpu.memory_space<vmem>>, vector<16x16xf32>
    %4 = arith.truncf %3 : vector<16x16xf32> to vector<16x16xbf16>
    %c0_2 = arith.constant 0 : index
    %c0_3 = arith.constant 0 : index
    %5 = vector.load %arg9[%c0_2, %c0_3] : memref<16x32xf32, #tpu.memory_space<vmem>>, vector<16x32xf32>
    %c0_4 = arith.constant 0 : index
    %c0_5 = arith.constant 0 : index
    %6 = vector.load %arg4[%c0_4, %c0_5] : memref<16x32xbf16, #tpu.memory_space<vmem>>, vector<16x32xbf16>
    %cst = arith.constant dense<0.000000e+00> : vector<16x32xf32>
    %7 = tpu.matmul %4, %6, %cst {dimension_numbers = #tpu.dot_dimension_numbers<[1], [0], [0], [1], [0, 0, 1, 1], [], []>} : vector<16x16xbf16>, vector<16x32xbf16>, vector<16x32xf32> -> vector<16x32xf32>
    %8 = arith.addf %5, %7 : vector<16x32xf32>
    %c0_6 = arith.constant 0 : index
    %c0_7 = arith.constant 0 : index
    %9 = vector.load %arg9[%c0_6, %c0_7] : memref<16x32xf32, #tpu.memory_space<vmem>>, vector<16x32xf32>
    tpu.vector_store %arg9[%c0_6, %c0_7], %8 {strides = array<i32>} : memref<16x32xf32, #tpu.memory_space<vmem>>, vector<16x32xf32>,
    %c0_i32_8 = arith.constant 0 : i32
    %10 = arith.cmpi eq, %arg2, %c0_i32_8 : i32
    %11 = arith.extui %10 : i1 to i32
    %c0_i32_9 = arith.constant 0 : i32
    %12 = arith.cmpi ne, %11, %c0_i32_9 : i32
    scf.if %12 {
      %c0_10 = arith.constant 0 : index
      %c0_11 = arith.constant 0 : index
      %13 = vector.load %arg9[%c0_10, %c0_11] : memref<16x32xf32, #tpu.memory_space<vmem>>, vector<16x32xf32>
      %c0_12 = arith.constant 0 : index
      %c0_13 = arith.constant 0 : index
      %14 = vector.load %arg5[%c0_12, %c0_13] : memref<1x32xf32, #tpu.memory_space<vmem>>, vector<1x32xf32>
      %15 = vector.broadcast %14 : vector<1x32xf32> to vector<16x32xf32>
      %16 = arith.addf %13, %15 : vector<16x32xf32>
      %17 = arith.truncf %16 : vector<16x32xf32> to vector<16x32xbf16>
      %c0_14 = arith.constant 0 : index
      %c0_15 = arith.constant 0 : index
      %18 = vector.load %arg8[%c0_14, %c0_15] : memref<16x32xbf16, #tpu.memory_space<vmem>>, vector<16x32xbf16>
      tpu.vector_store %arg8[%c0_14, %c0_15], %17 {strides = array<i32>} : memref<16x32xbf16, #tpu.memory_space<vmem>>, vector<16x32xbf16>,
    } else {
    }
    return
  }
  func.func @transform_0(%arg0: i32, %arg1: i32, %arg2: i32) -> (i32, i32) {
    %c0_i32 = arith.constant 0 : i32
    return %arg0, %arg2 : i32, i32
  }
  func.func @transform_1(%arg0: i32, %arg1: i32, %arg2: i32) -> (i32, i32) {
    %c0_i32 = arith.constant 0 : i32
    return %arg2, %arg1 : i32, i32
  }
  func.func @transform_2(%arg0: i32, %arg1: i32, %arg2: i32) -> (i32, i32) {
    %c0_i32 = arith.constant 0 : i32
    %c0_i32_0 = arith.constant 0 : i32
    return %c0_i32, %arg1 : i32, i32
  }
  func.func @transform_3(%arg0: i32, %arg1: i32, %arg2: i32) -> (i32, i32) {
    %c0_i32 = arith.constant 0 : i32
    %c0_i32_0 = arith.constant 0 : i32
    return %c0_i32, %arg1 : i32, i32
  }
  func.func @transform_4(%arg0: i32, %arg1: i32, %arg2: i32) -> (i32, i32) {
    %c0_i32 = arith.constant 0 : i32
    %c0_i32_0 = arith.constant 0 : i32
    return %c0_i32, %arg1 : i32, i32
  }
  func.func @transform_5(%arg0: i32, %arg1: i32, %arg2: i32) -> (i32, i32) {
    %c0_i32 = arith.constant 0 : i32
    return %arg0, %arg1 : i32, i32
  }
}

</mosaic_0001>

<llo_original>
// kernel: tpu_custom_call.1
$region0: #{tpu_custom_call.1}
  #allocation0 [shape = 'u32[]', space=smem, size = 0x4, offset = 0x4, fixed_abs, tag = 'smem constant byte address 0x4 - core index']
  #allocation1 [shape = 'u32[144,128]{1,0:T(1,128)}', space=vmem, size = 0x12000, scoped, tag = 'internal scratch']
  #allocation2 [shape = 'f32[16,32]{1,0:T(8,128)}', space=vmem, size = 0x2000, scoped, tag = 'scratch operand']
  %s0 = inlined_call_operand.hbm [shape: f32[16,16], index: 0, kind: input, shape index: {}]
  %s1 = inlined_call_operand.hbm [shape: bf16[16,32], index: 1, kind: input, shape index: {}]
  %s2 = inlined_call_operand.vmem [shape: f32[1,32], index: 2, kind: input, shape index: {}]
  %s3 = inlined_call_operand.vmem [shape: f32[1,32], index: 3, kind: input, shape index: {}]
  %s4 = inlined_call_operand.vmem [shape: f32[1,32], index: 4, kind: input, shape index: {}]
  %s5 = inlined_call_operand.hbm [shape: bf16[16,32], index: 5, kind: output, shape index: {}]
  %s6 = sld [smem:[#allocation0]]
  $region46: #{tpu_custom_call.1} parent=0
    _
  %s8 = ssub.s32 1, %s6
  %s9 = scalar_select 0, %s8, %s6
  $region1: #{tpu_custom_call.1} parent=0
    #allocation3 [shape = 'u8[8192]{0}', space=vmem, size = 0x2000, scoped, tag = 'input window, operand 0, single buffered']
    #allocation4 [shape = 's32[1]{0}', space=sflag, size = 0x4, scoped, tag = 'scoped memory for tpu_custom_call.1']
    #allocation5 [shape = 's32[1]{0}', space=sflag, size = 0x4, scoped, tag = 'scoped memory for tpu_custom_call.1']
    #allocation6 [shape = 'u8[4096]{0}', space=vmem, size = 0x1000, scoped, tag = 'input window, operand 1, single buffered']
    #allocation7 [shape = 's32[1]{0}', space=sflag, size = 0x4, scoped, tag = 'scoped memory for tpu_custom_call.1']
    #allocation8 [shape = 'u8[4096]{0}', space=vmem, size = 0x1000, scoped, tag = 'output window, operand 0, single buffered']
    %10 = vsyncpa [#allocation4], 0
    %11 = vsyncpa [#allocation7], 0
    %12 = vsyncpa [#allocation5], 0
    // Predicated region
    $region2: #{tpu_custom_call.1} parent=1 // pred_check
      _
    $region3: #{tpu_custom_call.1} parent=1 // pred_check_branch
      %14 = sbr.rel (0) target = $region5
    $region4: #{tpu_custom_call.1} parent=1 // pred_region
      %s16 = ssub.s32 256, 256
      %17 = vsyncadd [#allocation4], %s16
      %s18 = sshll.u32 [#allocation3], 4
      %s19 = int_to_ptr.vmem [resolvable:$true] %s18
      %24 = dma.hbm_to_vmem [thread:$0]  %s0, 256, %s19, [#allocation4], 128, 128, 8
    $region5: #{tpu_custom_call.1} parent=1 // pred_fallthru
      _
    // Predicated region
    $region6: #{tpu_custom_call.1} parent=1 // pred_check
      _
    $region7: #{tpu_custom_call.1} parent=1 // pred_check_branch
      %26 = sbr.rel (0) target = $region9
    $region8: #{tpu_custom_call.1} parent=1 // pred_region
      %s28 = ssub.s32 128, 128
      %29 = vsyncadd [#allocation7], %s28
      %s30 = sshll.u32 [#allocation6], 4
      %s31 = int_to_ptr.vmem [resolvable:$true] %s30
      %36 = dma.hbm_to_vmem [thread:$0]  %s1, 128, %s31, [#allocation7], 64, 64, 4
    $region9: #{tpu_custom_call.1} parent=1 // pred_fallthru
      _
    // Predicated region
    $region10: #{tpu_custom_call.1} parent=1 // pred_check
      _
    $region11: #{tpu_custom_call.1} parent=1 // pred_check_branch
      %38 = sbr.rel (0) target = $region13
    $region12: #{tpu_custom_call.1} parent=1 // pred_region
      _
    $region13: #{tpu_custom_call.1} parent=1 // pred_fallthru
      _
    // Predicated region
    $region14: #{tpu_custom_call.1} parent=1 // pred_check
      _
    $region15: #{tpu_custom_call.1} parent=1 // pred_check_branch
      %40 = sbr.rel (0) target = $region17
    $region16: #{tpu_custom_call.1} parent=1 // pred_region
      _
    $region17: #{tpu_custom_call.1} parent=1 // pred_fallthru
      _
    // Predicated region
    $region18: #{tpu_custom_call.1} parent=1 // pred_check
      _
    $region19: #{tpu_custom_call.1} parent=1 // pred_check_branch
      %42 = sbr.rel (0) target = $region21
    $region20: #{tpu_custom_call.1} parent=1 // pred_region
      _
    $region21: #{tpu_custom_call.1} parent=1 // pred_fallthru
      _
    // Predicated region
    $region22: #{tpu_custom_call.1} parent=1 // pred_check
      _
    $region23: #{tpu_custom_call.1} parent=1 // pred_check_branch
      %44 = sbr.rel (0) target = $region25
    $region24: #{tpu_custom_call.1} parent=1 // pred_region
      %45 = dma.done [#allocation4], 256
    $region25: #{tpu_custom_call.1} parent=1 // pred_fallthru
      _
    // Predicated region
    $region26: #{tpu_custom_call.1} parent=1 // pred_check
      _
    $region27: #{tpu_custom_call.1} parent=1 // pred_check_branch
      %47 = sbr.rel (0) target = $region29
    $region28: #{tpu_custom_call.1} parent=1 // pred_region
      %48 = dma.done [#allocation7], 128
    $region29: #{tpu_custom_call.1} parent=1 // pred_fallthru
      _
    %p50 = scmp.eq.s32.totalorder 0, 0
    // Predicated region
    $region30: #{tpu_custom_call.1} parent=1 // pred_check
      %p51 = pneg %p50
    $region31: #{tpu_custom_call.1} parent=1 // pred_check_branch
      %53 = sbr.rel (%p51) target = $region33
    $region32: #{tpu_custom_call.1} parent=1 // pred_region
      %vm54 = vcmask 261120
      %55 = vst.msk [vmem:[#allocation2] sm:$0xff] %vm54, 0.0
      %56 = vst.msk [vmem:[#allocation2 + $0x8] sm:$0xff] %vm54, 0.0
    $region33: #{tpu_custom_call.1} parent=1 // pred_fallthru
      _
    %v57 = vld [vmem:[#allocation3] sm:$0xff]
    %v58 = vld [vmem:[#allocation3 + $0x8] sm:$0xff]
    %v59 = vpack.c.bf16 %v58, %v57
    %v60 = vld [vmem:[#allocation2] sm:$0xff]
    %v61 = vld [vmem:[#allocation2 + $0x8] sm:$0xff]
    %v62 = vld [vmem:[#allocation6] sm:$0xf]
    %v63 = vld [vmem:[#allocation6 + $0x4] sm:$0xf]
    %v66 = vunpack.c.l.b16 %v62
    %v67 = vunpack.c.l.b16 %v63
    %v68 = vpack.c.b16 %v67, %v66
    %vm70 = vcmask 130048
    %v72 = vsel %vm70, %v59, 0
    %74 = vmatprep.subr.bf16.mxu0 0
    %75 = vmatpush1.bf16.msra.mxu0 %v68
    %76 = vmatprep.subr.bf16.mxu0 0
    %77 = vmatpush1.bf16.msra.mxu0 0
    %78 = vmatprep.subr.bf16.mxu0 0
    %79 = vmatpush1.bf16.msra.mxu0 0
    %80 = vmatprep.subr.bf16.mxu0 0
    %81 = vmatpush1.bf16.msra.mxu0 0
    %82 = vmatprep.subr.bf16.mxu0 0
    %83 = vmatpush1.bf16.msra.mxu0 0
    %84 = vmatprep.subr.bf16.mxu0 0
    %85 = vmatpush1.bf16.msra.mxu0 0
    %86 = vmatprep.subr.bf16.mxu0 0
    %87 = vmatpush1.bf16.msra.mxu0 0
    %88 = vmatprep.subr.bf16.mxu0 0
    %89 = vmatpush1.bf16.msra.mxu0 0
    %90 = vmatprep.subr.bf16.mxu0 0
    %91 = vmatpush1.bf16.msra.mxu0 0
    %92 = vmatprep.subr.bf16.mxu0 0
    %93 = vmatpush1.bf16.msra.mxu0 0
    %94 = vmatprep.subr.bf16.mxu0 0
    %95 = vmatpush1.bf16.msra.mxu0 0
    %96 = vmatprep.subr.bf16.mxu0 0
    %97 = vmatpush1.bf16.msra.mxu0 0
    %98 = vmatprep.subr.bf16.mxu0 0
    %99 = vmatpush1.bf16.msra.mxu0 0
    %100 = vmatprep.subr.bf16.mxu0 0
    %101 = vmatpush1.bf16.msra.mxu0 0
    %102 = vmatprep.subr.bf16.mxu0 0
    %103 = vmatpush1.bf16.msra.mxu0 0
    %104 = vmatprep.subr.bf16.mxu0 0
    %105 = vmatpush1.bf16.msra.mxu0 0
    %106 = vmatprep.mubr.bf16.mxu0 0
    %107 = vmatmul.mubr.bf16.gmra.mrb[0].mxu0 %v72
    %v108 = vpop.f32.mrb[0].mxu0
    %v109 = vadd.f32 0.0, %v108
    %v110 = vpop.f32.mrb[0].mxu0
    %v111 = vpop.f32.mrb[0].mxu0
    %v112 = vadd.f32 0.0, %v111
    %v113 = vpop.f32.mrb[0].mxu0
    %114 = vdwg.mxu0
    %v115 = vadd.f32 %v60, %v109
    %v116 = vadd.f32 %v61, %v112
    %vm117 = vcmask 261120
    %118 = vst.msk [vmem:[#allocation2] sm:$0xff] %vm117, %v115
    %119 = vst.msk [vmem:[#allocation2 + $0x8] sm:$0xff] %vm117, %v116
    // Predicated region
    $region34: #{tpu_custom_call.1} parent=1 // pred_check
      %p120 = pneg %p50
    $region35: #{tpu_custom_call.1} parent=1 // pred_check_branch
      %122 = sbr.rel (%p120) target = $region37
    $region36: #{tpu_custom_call.1} parent=1 // pred_region
      %v123 = vld [vmem:[#allocation2] sm:$0xff]
      %v124 = vld [vmem:[#allocation2 + $0x8] sm:$0xff]
      %v125 = vld [vmem:[%s2] sm:$0x1]
      %v127 = vlaneseq
      %v128 = vshrl.u32 %v127, 7
      %v129 = vsub.s32 0, %v128
      %v130 = vrot.slane %v125, %v129
      %v132 = vadd.f32 %v123, %v130
      %v133 = vadd.f32 %v124, %v130
      %v134 = vpack.c.bf16 %v133, %v132
      %v136 = vunpack.c.l.b16 %v134
      %v137 = vunpack.c.h.b16 %v134
      %v138 = vpack.c.b16 %v136, %v136
      %v139 = vpack.c.b16 %v137, %v137
      %vm142 = vcmask 257024
      %143 = vst.msk [vmem:[#allocation8] sm:$0xf] %vm142, %v138
      %144 = vst.msk [vmem:[#allocation8 + $0x4] sm:$0xf] %vm142, %v139
    $region37: #{tpu_custom_call.1} parent=1 // pred_fallthru
      _
    // Predicated region
    $region38: #{tpu_custom_call.1} parent=1 // pred_check
      _
    $region39: #{tpu_custom_call.1} parent=1 // pred_check_branch
      %146 = sbr.rel (0) target = $region41
    $region40: #{tpu_custom_call.1} parent=1 // pred_region
      %s148 = ssub.s32 128, 128
      %149 = vsyncadd [#allocation5], %s148
      %s150 = sshll.u32 [#allocation8], 4
      %s151 = int_to_ptr.vmem [resolvable:$true] %s150
      %156 = dma.vmem_to_hbm [thread:$0]  %s151, 128, %s5, [#allocation5], 64, 64, 4
    $region41: #{tpu_custom_call.1} parent=1 // pred_fallthru
      _
    // Predicated region
    $region42: #{tpu_custom_call.1} parent=1 // pred_check
      _
    $region43: #{tpu_custom_call.1} parent=1 // pred_check_branch
      %158 = sbr.rel (0) target = $region45
    $region44: #{tpu_custom_call.1} parent=1 // pred_region
      %159 = dma.done [#allocation5], 128
    $region45: #{tpu_custom_call.1} parent=1 // pred_fallthru
      _
    %160 = vsyncpa [#allocation4], 1
    %161 = vsyncpa [#allocation7], 1
    %162 = vsyncpa [#allocation5], 1

</llo_original>
